<compile_context>
chip_gen: v7x
topology: tpu7x:2x2x1
jax: 0.10.0
libtpu: 0.0.40
codegen_flags: <defaults>
</compile_context>

<pallas_src>
from functools import partial

import jax
import jax.numpy as jnp
from jax.experimental import pallas as pl
from jax.experimental.pallas import tpu as pltpu

LANE = 128  # TPU lane width


# ----------------------------- Pallas kernel ------------------------------- #

def _fused_mlp_kernel(*refs, num_hidden_layers, eps):
    """refs = (x_bf16, w_in, g_in, b_in, [w_h, g_h, b_h] * L, w_out_pad, b_out_pad, out)."""
    n_in = 4 + 3 * num_hidden_layers + 2
    in_refs = refs[:n_in]
    o_ref = refs[n_in]

    def linear_bn_relu(a_bf16, w_ref, g_ref, b_ref):
        # MXU matmul: bf16 operands, f32 accumulation.
        h = jnp.dot(a_bf16, w_ref[...], preferred_element_type=jnp.float32)
        # Training-mode BN (biased batch variance), two-pass centered form.
        mean = jnp.mean(h, axis=0, keepdims=True)          # (1, F) XLU reduce
        c = h - mean                                        # reused for var & affine
        var = jnp.mean(c * c, axis=0, keepdims=True)        # (1, F) XLU reduce
        # Fold gamma * rsqrt(var+eps) into one per-column scale (cheap (1,F) math);
        # with the centered activation, beta is the shift directly.
        scale = g_ref[...] * jax.lax.rsqrt(var + eps)       # (1, F)
        return jnp.maximum(c * scale + b_ref[...], 0.0)     # ReLU, f32 epilogue

    # input_layers (x already bf16 from the wrapper: no in-kernel cast)
    a = linear_bn_relu(in_refs[0][...], in_refs[1], in_refs[2], in_refs[3])

    # hidden_layers (static Python unroll; activations stay in VMEM/vregs)
    idx = 4
    for _ in range(num_hidden_layers):
        a = linear_bn_relu(a.astype(jnp.bfloat16),
                           in_refs[idx], in_refs[idx + 1], in_refs[idx + 2])
        idx += 3

    # out_layers: Linear(bias=True), lane-dense padded output
    w_out_ref = in_refs[idx]
    b_out_ref = in_refs[idx + 1]
    out = jnp.dot(a.astype(jnp.bfloat16), w_out_ref[...],
                  preferred_element_type=jnp.float32)
    o_ref[...] = out + b_out_ref[...]


# ------------------------------ wrapper ------------------------------------ #

def mlp_forward(params, x_nchw, *, eps=1e-5):
    """Fused MLP forward. x_nchw: (N, C, H, W) -> logits (N, num_classes)."""
    n = x_nchw.shape[0]
    # nn.Flatten() glue (plain JAX). bf16 here halves the largest HBM->VMEM DMA
    # and removes an in-kernel cast; the matmul was bf16 anyway.
    x = x_nchw.reshape(n, -1).astype(jnp.bfloat16)
    num_inputs = x.shape[1]

    num_hidden_layers = len(params["hidden"])
    num_neurons = params["w_in"].shape[1]
    inputs = [x, params["w_in"], params["gamma_in"], params["beta_in"]]
    for layer in params["hidden"]:
        inputs += [layer["w"], layer["gamma"], layer["beta"]]
    inputs += [params["w_out_pad"], params["b_out_pad"]]

    c_pad = params["w_out_pad"].shape[1]
    vmem = pl.BlockSpec(memory_space=pltpu.MemorySpace.VMEM)  # whole array in VMEM

    # Advisory cost hint: matmul flops dominate; rsqrt per feature per BN layer.
    flops = 2 * n * (num_inputs * num_neurons
                     + num_hidden_layers * num_neurons * num_neurons
                     + num_neurons * c_pad)
    bytes_accessed = (sum(int(a.size) * a.dtype.itemsize for a in inputs)
                      + n * c_pad * 4)
    cost = pl.CostEstimate(flops=flops,
                           transcendentals=(1 + num_hidden_layers) * num_neurons,
                           bytes_accessed=bytes_accessed)

    out_pad = pl.pallas_call(
        partial(_fused_mlp_kernel,
                num_hidden_layers=num_hidden_layers, eps=eps),
        out_shape=jax.ShapeDtypeStruct((n, c_pad), jnp.float32),
        in_specs=[vmem] * len(inputs),
        out_specs=vmem,
        cost_estimate=cost,
    )(*inputs)

    # Slice padded lane-dense output back to num_classes (glue, plain JAX).
    return out_pad[:, : params["num_classes"]]


# ------------------------------ params ------------------------------------- #

def init_mlp_params(key, num_inputs, num_neurons, num_hidden_layers, num_classes):
    """Synthetic init. PyTorch Linear weight is (out, in); we store transposed
    (in, out) in bf16 for the MXU. BN gamma/beta and bias stay f32."""
    params = {"num_classes": num_classes}
    k = key

    k, sub = jax.random.split(k)
    params["w_in"] = (jax.random.normal(sub, (num_inputs, num_neurons), jnp.float32)
                      * (1.0 / jnp.sqrt(num_inputs))).astype(jnp.bfloat16)
    params["gamma_in"] = jnp.ones((1, num_neurons), jnp.float32)
    params["beta_in"] = jnp.zeros((1, num_neurons), jnp.float32)

    params["hidden"] = []
    for _ in range(num_hidden_layers):
        k, sub = jax.random.split(k)
        w = (jax.random.normal(sub, (num_neurons, num_neurons), jnp.float32)
             * (1.0 / jnp.sqrt(num_neurons))).astype(jnp.bfloat16)
        params["hidden"].append(
            dict(w=w,
                 gamma=jnp.ones((1, num_neurons), jnp.float32),
                 beta=jnp.zeros((1, num_neurons), jnp.float32)))

    # Final layer, zero-padded to a lane-dense multiple of 128 output columns.
    c_pad = ((num_classes + LANE - 1) // LANE) * LANE
    k, sub = jax.random.split(k)
    w_out = (jax.random.normal(sub, (num_neurons, num_classes), jnp.float32)
             * (1.0 / jnp.sqrt(num_neurons)))
    k, sub = jax.random.split(k)
    b_out = jax.random.normal(sub, (1, num_classes), jnp.float32) * 0.01

    params["w_out_pad"] = (jnp.zeros((num_neurons, c_pad), jnp.bfloat16)
                           .at[:, :num_classes].set(w_out.astype(jnp.bfloat16)))
    params["b_out_pad"] = (jnp.zeros((1, c_pad), jnp.float32)
                           .at[:, :num_classes].set(b_out))
    return params


# ----------------------------- JAX reference -------------------------------- #

def mlp_forward_ref(params, x_nchw, eps=1e-5):
    """Pure-JAX reference: straightforward training-mode BN formula, same bf16
    matmul precision as the kernel (validates the folded/centered kernel math)."""
    n = x_nchw.shape[0]
    x = x_nchw.reshape(n, -1).astype(jnp.bfloat16)

    def lbr(a, w, g, b):
        h = jnp.dot(a, w, preferred_element_type=jnp.float32)
        m = jnp.mean(h, axis=0, keepdims=True)
        v = jnp.mean((h - m) ** 2, axis=0, keepdims=True)   # biased batch var
        y = (h - m) / jnp.sqrt(v + eps) * g + b
        return jnp.maximum(y, 0.0)

    o = lbr(x, params["w_in"], params["gamma_in"], params["beta_in"])
    for layer in params["hidden"]:
        o = lbr(o.astype(jnp.bfloat16), layer["w"], layer["gamma"], layer["beta"])
    out = (jnp.dot(o.astype(jnp.bfloat16), params["w_out_pad"],
                   preferred_element_type=jnp.float32) + params["b_out_pad"])
    return out[:, : params["num_classes"]]


# --------------------------------- main ------------------------------------- #

if __name__ == "__main__":
    # Small shapes consistent with the module: in_chl=1, 16x16 images.
    batch = 8
    in_chl, H, W = 1, 16, 16
    num_inputs = in_chl * H * W          # 256
    num_neurons = 128
    num_hidden_layers = 1
    num_classes = 10

    key = jax.random.PRNGKey(0)
    key, kx = jax.random.split(key)
    x = jax.random.normal(kx, (batch, in_chl, H, W), jnp.float32)  # NCHW

    params = init_mlp_params(key, num_inputs, num_neurons,
                             num_hidden_layers, num_classes)

    out = jax.block_until_ready(mlp_forward(params, x))
    ref = jax.block_until_ready(mlp_forward_ref(params, x))

    assert out.shape == (batch, num_classes)
    assert jnp.allclose(out, ref, atol=2e-3, rtol=2e-3), "mismatch vs JAX reference"
    print("KERNEL_OK")
</pallas_src>

<mosaic_0001>
module attributes {stable_mosaic.version = 11 : i64} {
  func.func @_fused_mlp_kernel(%arg0: memref<8x256xbf16, #tpu.memory_space<vmem>>, %arg1: memref<256x128xbf16, #tpu.memory_space<vmem>>, %arg2: memref<1x128xf32, #tpu.memory_space<vmem>>, %arg3: memref<1x128xf32, #tpu.memory_space<vmem>>, %arg4: memref<128x128xbf16, #tpu.memory_space<vmem>>, %arg5: memref<1x128xf32, #tpu.memory_space<vmem>>, %arg6: memref<1x128xf32, #tpu.memory_space<vmem>>, %arg7: memref<128x128xbf16, #tpu.memory_space<vmem>>, %arg8: memref<1x128xf32, #tpu.memory_space<vmem>>, %arg9: memref<8x128xf32, #tpu.memory_space<vmem>>) attributes {dimension_semantics = [], scalar_prefetch = 0 : i64, scratch_operands = 0 : i64, tpu.core_type = #tpu.core_type<tc>} {
    %c0 = arith.constant 0 : index
    %c0_0 = arith.constant 0 : index
    %0 = vector.load %arg0[%c0, %c0_0] : memref<8x256xbf16, #tpu.memory_space<vmem>>, vector<8x256xbf16>
    %c0_1 = arith.constant 0 : index
    %c0_2 = arith.constant 0 : index
    %1 = vector.load %arg1[%c0_1, %c0_2] : memref<256x128xbf16, #tpu.memory_space<vmem>>, vector<256x128xbf16>
    %cst = arith.constant dense<0.000000e+00> : vector<8x128xf32>
    %2 = tpu.matmul %0, %1, %cst {dimension_numbers = #tpu.dot_dimension_numbers<[1], [0], [0], [1], [0, 0, 1, 1], [], []>} : vector<8x256xbf16>, vector<256x128xbf16>, vector<8x128xf32> -> vector<8x128xf32>
    %cst_3 = arith.constant dense<0.000000e+00> : vector<128xf32>
    %3 = vector.multi_reduction <add>, %2, %cst_3 [0] : vector<8x128xf32> to vector<128xf32>
    %4 = vector.shape_cast %3 : vector<128xf32> to vector<1x128xf32>
    %cst_4 = arith.constant 8.000000e+00 : f32
    %5 = vector.broadcast %cst_4 : f32 to vector<1x128xf32>
    %6 = arith.divf %4, %5 : vector<1x128xf32>
    %7 = vector.broadcast %6 : vector<1x128xf32> to vector<8x128xf32>
    %8 = arith.subf %2, %7 : vector<8x128xf32>
    %9 = arith.mulf %8, %8 : vector<8x128xf32>
    %cst_5 = arith.constant dense<0.000000e+00> : vector<128xf32>
    %10 = vector.multi_reduction <add>, %9, %cst_5 [0] : vector<8x128xf32> to vector<128xf32>
    %11 = vector.shape_cast %10 : vector<128xf32> to vector<1x128xf32>
    %cst_6 = arith.constant 8.000000e+00 : f32
    %12 = vector.broadcast %cst_6 : f32 to vector<1x128xf32>
    %13 = arith.divf %11, %12 : vector<1x128xf32>
    %c0_7 = arith.constant 0 : index
    %c0_8 = arith.constant 0 : index
    %14 = vector.load %arg2[%c0_7, %c0_8] : memref<1x128xf32, #tpu.memory_space<vmem>>, vector<1x128xf32>
    %cst_9 = arith.constant 9.99999974E-6 : f32
    %15 = vector.broadcast %cst_9 : f32 to vector<1x128xf32>
    %16 = arith.addf %13, %15 : vector<1x128xf32>
    %17 = math.rsqrt %16 : vector<1x128xf32>
    %18 = arith.mulf %14, %17 : vector<1x128xf32>
    %19 = vector.broadcast %18 : vector<1x128xf32> to vector<8x128xf32>
    %20 = arith.mulf %8, %19 : vector<8x128xf32>
    %c0_10 = arith.constant 0 : index
    %c0_11 = arith.constant 0 : index
    %21 = vector.load %arg3[%c0_10, %c0_11] : memref<1x128xf32, #tpu.memory_space<vmem>>, vector<1x128xf32>
    %22 = vector.broadcast %21 : vector<1x128xf32> to vector<8x128xf32>
    %23 = arith.addf %20, %22 : vector<8x128xf32>
    %cst_12 = arith.constant 0.000000e+00 : f32
    %24 = vector.broadcast %cst_12 : f32 to vector<8x128xf32>
    %25 = arith.maximumf %23, %24 : vector<8x128xf32>
    %26 = arith.truncf %25 : vector<8x128xf32> to vector<8x128xbf16>
    %c0_13 = arith.constant 0 : index
    %c0_14 = arith.constant 0 : index
    %27 = vector.load %arg4[%c0_13, %c0_14] : memref<128x128xbf16, #tpu.memory_space<vmem>>, vector<128x128xbf16>
    %cst_15 = arith.constant dense<0.000000e+00> : vector<8x128xf32>
    %28 = tpu.matmul %26, %27, %cst_15 {dimension_numbers = #tpu.dot_dimension_numbers<[1], [0], [0], [1], [0, 0, 1, 1], [], []>} : vector<8x128xbf16>, vector<128x128xbf16>, vector<8x128xf32> -> vector<8x128xf32>
    %cst_16 = arith.constant dense<0.000000e+00> : vector<128xf32>
    %29 = vector.multi_reduction <add>, %28, %cst_16 [0] : vector<8x128xf32> to vector<128xf32>
    %30 = vector.shape_cast %29 : vector<128xf32> to vector<1x128xf32>
    %cst_17 = arith.constant 8.000000e+00 : f32
    %31 = vector.broadcast %cst_17 : f32 to vector<1x128xf32>
    %32 = arith.divf %30, %31 : vector<1x128xf32>
    %33 = vector.broadcast %32 : vector<1x128xf32> to vector<8x128xf32>
    %34 = arith.subf %28, %33 : vector<8x128xf32>
    %35 = arith.mulf %34, %34 : vector<8x128xf32>
    %cst_18 = arith.constant dense<0.000000e+00> : vector<128xf32>
    %36 = vector.multi_reduction <add>, %35, %cst_18 [0] : vector<8x128xf32> to vector<128xf32>
    %37 = vector.shape_cast %36 : vector<128xf32> to vector<1x128xf32>
    %cst_19 = arith.constant 8.000000e+00 : f32
    %38 = vector.broadcast %cst_19 : f32 to vector<1x128xf32>
    %39 = arith.divf %37, %38 : vector<1x128xf32>
    %c0_20 = arith.constant 0 : index
    %c0_21 = arith.constant 0 : index
    %40 = vector.load %arg5[%c0_20, %c0_21] : memref<1x128xf32, #tpu.memory_space<vmem>>, vector<1x128xf32>
    %cst_22 = arith.constant 9.99999974E-6 : f32
    %41 = vector.broadcast %cst_22 : f32 to vector<1x128xf32>
    %42 = arith.addf %39, %41 : vector<1x128xf32>
    %43 = math.rsqrt %42 : vector<1x128xf32>
    %44 = arith.mulf %40, %43 : vector<1x128xf32>
    %45 = vector.broadcast %44 : vector<1x128xf32> to vector<8x128xf32>
    %46 = arith.mulf %34, %45 : vector<8x128xf32>
    %c0_23 = arith.constant 0 : index
    %c0_24 = arith.constant 0 : index
    %47 = vector.load %arg6[%c0_23, %c0_24] : memref<1x128xf32, #tpu.memory_space<vmem>>, vector<1x128xf32>
    %48 = vector.broadcast %47 : vector<1x128xf32> to vector<8x128xf32>
    %49 = arith.addf %46, %48 : vector<8x128xf32>
    %cst_25 = arith.constant 0.000000e+00 : f32
    %50 = vector.broadcast %cst_25 : f32 to vector<8x128xf32>
    %51 = arith.maximumf %49, %50 : vector<8x128xf32>
    %52 = arith.truncf %51 : vector<8x128xf32> to vector<8x128xbf16>
    %c0_26 = arith.constant 0 : index
    %c0_27 = arith.constant 0 : index
    %53 = vector.load %arg7[%c0_26, %c0_27] : memref<128x128xbf16, #tpu.memory_space<vmem>>, vector<128x128xbf16>
    %cst_28 = arith.constant dense<0.000000e+00> : vector<8x128xf32>
    %54 = tpu.matmul %52, %53, %cst_28 {dimension_numbers = #tpu.dot_dimension_numbers<[1], [0], [0], [1], [0, 0, 1, 1], [], []>} : vector<8x128xbf16>, vector<128x128xbf16>, vector<8x128xf32> -> vector<8x128xf32>
    %c0_29 = arith.constant 0 : index
    %c0_30 = arith.constant 0 : index
    %55 = vector.load %arg8[%c0_29, %c0_30] : memref<1x128xf32, #tpu.memory_space<vmem>>, vector<1x128xf32>
    %56 = vector.broadcast %55 : vector<1x128xf32> to vector<8x128xf32>
    %57 = arith.addf %54, %56 : vector<8x128xf32>
    %c0_31 = arith.constant 0 : index
    %c0_32 = arith.constant 0 : index
    %58 = vector.load %arg9[%c0_31, %c0_32] : memref<8x128xf32, #tpu.memory_space<vmem>>, vector<8x128xf32>
    tpu.vector_store %arg9[%c0_31, %c0_32], %57 {strides = array<i32>} : memref<8x128xf32, #tpu.memory_space<vmem>>, vector<8x128xf32>,
    return
  }
}

</mosaic_0001>

<llo_original>
// kernel: tpu_custom_call.1
$region0: #{tpu_custom_call.1}
  #allocation0 [shape = 'u32[]', space=smem, size = 0x4, offset = 0x4, fixed_abs, tag = 'smem constant byte address 0x4 - core index']
  #allocation1 [shape = 'u32[144,128]{1,0:T(1,128)}', space=vmem, size = 0x12000, scoped, tag = 'internal scratch']
  %s0 = inlined_call_operand.hbm [shape: bf16[8,256], index: 0, kind: input, shape index: {}]
  %s1 = inlined_call_operand.hbm [shape: bf16[256,128], index: 1, kind: input, shape index: {}]
  %s2 = inlined_call_operand.vmem [shape: f32[1,128], index: 2, kind: input, shape index: {}]
  %s3 = inlined_call_operand.vmem [shape: f32[1,128], index: 3, kind: input, shape index: {}]
  %s4 = inlined_call_operand.hbm [shape: bf16[128,128], index: 4, kind: input, shape index: {}]
  %s5 = inlined_call_operand.vmem [shape: f32[1,128], index: 5, kind: input, shape index: {}]
  %s6 = inlined_call_operand.vmem [shape: f32[1,128], index: 6, kind: input, shape index: {}]
  %s7 = inlined_call_operand.hbm [shape: bf16[128,128], index: 7, kind: input, shape index: {}]
  %s8 = inlined_call_operand.vmem [shape: f32[1,128], index: 8, kind: input, shape index: {}]
  %s9 = inlined_call_operand.hbm [shape: f32[8,128], index: 9, kind: output, shape index: {}]
  %s10 = sld [smem:[#allocation0]]
  $region62: #{tpu_custom_call.1} parent=0
    _
  %s12 = ssub.s32 1, %s10
  %s13 = scalar_select 0, %s12, %s10
  $region1: #{tpu_custom_call.1} parent=0
    #allocation2 [shape = 'u8[4096]{0}', space=vmem, size = 0x1000, scoped, tag = 'input window, operand 0, single buffered']
    #allocation3 [shape = 's32[1]{0}', space=sflag, size = 0x4, scoped, tag = 'scoped memory for tpu_custom_call.1']
    #allocation4 [shape = 's32[1]{0}', space=sflag, size = 0x4, scoped, tag = 'scoped memory for tpu_custom_call.1']
    #allocation5 [shape = 'u8[65536]{0}', space=vmem, size = 0x10000, scoped, tag = 'input window, operand 1, single buffered']
    #allocation6 [shape = 's32[1]{0}', space=sflag, size = 0x4, scoped, tag = 'scoped memory for tpu_custom_call.1']
    #allocation7 [shape = 'u8[32768]{0}', space=vmem, size = 0x8000, scoped, tag = 'input window, operand 4, single buffered']
    #allocation8 [shape = 'u8[32768]{0}', space=vmem, size = 0x8000, scoped, tag = 'input window, operand 7, single buffered']
    #allocation9 [shape = 's32[1]{0}', space=sflag, size = 0x4, scoped, tag = 'scoped memory for tpu_custom_call.1']
    #allocation10 [shape = 'u8[4096]{0}', space=vmem, size = 0x1000, scoped, tag = 'output window, operand 0, single buffered']
    %14 = vsyncpa [#allocation3], 0
    %15 = vsyncpa [#allocation6], 0
    %16 = vsyncpa [#allocation9], 0
    %17 = vsyncpa [#allocation4], 0
    // Predicated region
    $region2: #{tpu_custom_call.1} parent=1 // pred_check
      _
    $region3: #{tpu_custom_call.1} parent=1 // pred_check_branch
      %19 = sbr.rel (0) target = $region5
    $region4: #{tpu_custom_call.1} parent=1 // pred_region
      %s21 = ssub.s32 128, 128
      %22 = vsyncadd [#allocation3], %s21
      %s24 = sshll.u32 [#allocation2], 4
      %s25 = int_to_ptr.vmem [resolvable:$true] %s24
      %27 = dma.hbm_to_vmem [thread:$0]  %s0, 128, %s25, [#allocation3]
    $region5: #{tpu_custom_call.1} parent=1 // pred_fallthru
      _
    // Predicated region
    $region6: #{tpu_custom_call.1} parent=1 // pred_check
      _
    $region7: #{tpu_custom_call.1} parent=1 // pred_check_branch
      %29 = sbr.rel (0) target = $region9
    $region8: #{tpu_custom_call.1} parent=1 // pred_region
      %s31 = ssub.s32 2048, 2048
      %32 = vsyncadd [#allocation6], %s31
      %s33 = sshll.u32 [#allocation5], 4
      %s34 = int_to_ptr.vmem [resolvable:$true] %s33
      %39 = dma.hbm_to_vmem [thread:$0]  %s1, 2048, %s34, [#allocation6], 64, 64, 4
    $region9: #{tpu_custom_call.1} parent=1 // pred_fallthru
      _
    // Predicated region
    $region10: #{tpu_custom_call.1} parent=1 // pred_check
      _
    $region11: #{tpu_custom_call.1} parent=1 // pred_check_branch
      %41 = sbr.rel (0) target = $region13
    $region12: #{tpu_custom_call.1} parent=1 // pred_region
      _
    $region13: #{tpu_custom_call.1} parent=1 // pred_fallthru
      _
    // Predicated region
    $region14: #{tpu_custom_call.1} parent=1 // pred_check
      _
    $region15: #{tpu_custom_call.1} parent=1 // pred_check_branch
      %43 = sbr.rel (0) target = $region17
    $region16: #{tpu_custom_call.1} parent=1 // pred_region
      _
    $region17: #{tpu_custom_call.1} parent=1 // pred_fallthru
      _
    // Predicated region
    $region18: #{tpu_custom_call.1} parent=1 // pred_check
      _
    $region19: #{tpu_custom_call.1} parent=1 // pred_check_branch
      %45 = sbr.rel (0) target = $region21
    $region20: #{tpu_custom_call.1} parent=1 // pred_region
      %s47 = ssub.s32 1024, 1024
      %48 = vsyncadd [#allocation6], %s47
      %s49 = sshll.u32 [#allocation7], 4
      %s50 = int_to_ptr.vmem [resolvable:$true] %s49
      %55 = dma.hbm_to_vmem [thread:$0]  %s4, 1024, %s50, [#allocation6], 64, 64, 4
    $region21: #{tpu_custom_call.1} parent=1 // pred_fallthru
      _
    // Predicated region
    $region22: #{tpu_custom_call.1} parent=1 // pred_check
      _
    $region23: #{tpu_custom_call.1} parent=1 // pred_check_branch
      %57 = sbr.rel (0) target = $region25
    $region24: #{tpu_custom_call.1} parent=1 // pred_region
      _
    $region25: #{tpu_custom_call.1} parent=1 // pred_fallthru
      _
    // Predicated region
    $region26: #{tpu_custom_call.1} parent=1 // pred_check
      _
    $region27: #{tpu_custom_call.1} parent=1 // pred_check_branch
      %59 = sbr.rel (0) target = $region29
    $region28: #{tpu_custom_call.1} parent=1 // pred_region
      _
    $region29: #{tpu_custom_call.1} parent=1 // pred_fallthru
      _
    // Predicated region
    $region30: #{tpu_custom_call.1} parent=1 // pred_check
      _
    $region31: #{tpu_custom_call.1} parent=1 // pred_check_branch
      %61 = sbr.rel (0) target = $region33
    $region32: #{tpu_custom_call.1} parent=1 // pred_region
      %s63 = ssub.s32 1024, 1024
      %64 = vsyncadd [#allocation9], %s63
      %s65 = sshll.u32 [#allocation8], 4
      %s66 = int_to_ptr.vmem [resolvable:$true] %s65
      %71 = dma.hbm_to_vmem [thread:$0]  %s7, 1024, %s66, [#allocation9], 64, 64, 4
    $region33: #{tpu_custom_call.1} parent=1 // pred_fallthru
      _
    // Predicated region
    $region34: #{tpu_custom_call.1} parent=1 // pred_check
      _
    $region35: #{tpu_custom_call.1} parent=1 // pred_check_branch
      %73 = sbr.rel (0) target = $region37
    $region36: #{tpu_custom_call.1} parent=1 // pred_region
      _
    $region37: #{tpu_custom_call.1} parent=1 // pred_fallthru
      _
    // Predicated region
    $region38: #{tpu_custom_call.1} parent=1 // pred_check
      _
    $region39: #{tpu_custom_call.1} parent=1 // pred_check_branch
      %75 = sbr.rel (0) target = $region41
    $region40: #{tpu_custom_call.1} parent=1 // pred_region
      %76 = dma.done [#allocation3], 128
    $region41: #{tpu_custom_call.1} parent=1 // pred_fallthru
      _
    // Predicated region
    $region42: #{tpu_custom_call.1} parent=1 // pred_check
      _
    $region43: #{tpu_custom_call.1} parent=1 // pred_check_branch
      %78 = sbr.rel (0) target = $region45
    $region44: #{tpu_custom_call.1} parent=1 // pred_region
      %79 = dma.done [#allocation6], 2048
    $region45: #{tpu_custom_call.1} parent=1 // pred_fallthru
      _
    // Predicated region
    $region46: #{tpu_custom_call.1} parent=1 // pred_check
      _
    $region47: #{tpu_custom_call.1} parent=1 // pred_check_branch
      %81 = sbr.rel (0) target = $region49
    $region48: #{tpu_custom_call.1} parent=1 // pred_region
      %82 = dma.done [#allocation6], 1024
    $region49: #{tpu_custom_call.1} parent=1 // pred_fallthru
      _
    // Predicated region
    $region50: #{tpu_custom_call.1} parent=1 // pred_check
      _
    $region51: #{tpu_custom_call.1} parent=1 // pred_check_branch
      %84 = sbr.rel (0) target = $region53
    $region52: #{tpu_custom_call.1} parent=1 // pred_region
      %85 = dma.done [#allocation9], 1024
    $region53: #{tpu_custom_call.1} parent=1 // pred_fallthru
      _
    %v87 = vld [vmem:[#allocation2] sm:$0xff]
    %v88 = vld [vmem:[#allocation5] sm:$0xf]
    %v89 = vld [vmem:[#allocation5 + $0x4] sm:$0xf]
    %v90 = vld [vmem:[#allocation5 + $0x8] sm:$0xf]
    %v91 = vld [vmem:[#allocation5 + $0xc] sm:$0xf]
    %v92 = vld [vmem:[#allocation5 + $0x10] sm:$0xf]
    %v93 = vld [vmem:[#allocation5 + $0x14] sm:$0xf]
    %v94 = vld [vmem:[#allocation5 + $0x18] sm:$0xf]
    %v95 = vld [vmem:[#allocation5 + $0x1c] sm:$0xf]
    %v96 = vld [vmem:[#allocation5 + $0x20] sm:$0xf]
    %v97 = vld [vmem:[#allocation5 + $0x24] sm:$0xf]
    %v98 = vld [vmem:[#allocation5 + $0x28] sm:$0xf]
    %v99 = vld [vmem:[#allocation5 + $0x2c] sm:$0xf]
    %v100 = vld [vmem:[#allocation5 + $0x30] sm:$0xf]
    %v101 = vld [vmem:[#allocation5 + $0x34] sm:$0xf]
    %v102 = vld [vmem:[#allocation5 + $0x38] sm:$0xf]
    %v103 = vld [vmem:[#allocation5 + $0x3c] sm:$0xf]
    %v104 = vld [vmem:[#allocation5 + $0x40] sm:$0xf]
    %v105 = vld [vmem:[#allocation5 + $0x44] sm:$0xf]
    %v106 = vld [vmem:[#allocation5 + $0x48] sm:$0xf]
    %v107 = vld [vmem:[#allocation5 + $0x4c] sm:$0xf]
    %v108 = vld [vmem:[#allocation5 + $0x50] sm:$0xf]
    %v109 = vld [vmem:[#allocation5 + $0x54] sm:$0xf]
    %v110 = vld [vmem:[#allocation5 + $0x58] sm:$0xf]
    %v111 = vld [vmem:[#allocation5 + $0x5c] sm:$0xf]
    %v112 = vld [vmem:[#allocation5 + $0x60] sm:$0xf]
    %v113 = vld [vmem:[#allocation5 + $0x64] sm:$0xf]
    %v114 = vld [vmem:[#allocation5 + $0x68] sm:$0xf]
    %v115 = vld [vmem:[#allocation5 + $0x6c] sm:$0xf]
    %v116 = vld [vmem:[#allocation5 + $0x70] sm:$0xf]
    %v117 = vld [vmem:[#allocation5 + $0x74] sm:$0xf]
    %v118 = vld [vmem:[#allocation5 + $0x78] sm:$0xf]
    %v119 = vld [vmem:[#allocation5 + $0x7c] sm:$0xf]
    %v121 = vunpack.c.l.b16 %v87
    %v122 = vunpack.c.h.b16 %v87
    %v123 = vpack.c.b16 %v121, %v121
    %v124 = vpack.c.b16 %v122, %v122
    %v159 = vunpack.c.l.b16 %v88
    %v160 = vunpack.c.l.b16 %v89
    %v161 = vunpack.c.l.b16 %v90
    %v162 = vunpack.c.l.b16 %v91
    %v163 = vunpack.c.l.b16 %v92
    %v164 = vunpack.c.l.b16 %v93
    %v165 = vunpack.c.l.b16 %v94
    %v166 = vunpack.c.l.b16 %v95
    %v167 = vunpack.c.l.b16 %v96
    %v168 = vunpack.c.l.b16 %v97
    %v169 = vunpack.c.l.b16 %v98
    %v170 = vunpack.c.l.b16 %v99
    %v171 = vunpack.c.l.b16 %v100
    %v172 = vunpack.c.l.b16 %v101
    %v173 = vunpack.c.l.b16 %v102
    %v174 = vunpack.c.l.b16 %v103
    %v175 = vunpack.c.l.b16 %v104
    %v176 = vunpack.c.l.b16 %v105
    %v177 = vunpack.c.l.b16 %v106
    %v178 = vunpack.c.l.b16 %v107
    %v179 = vunpack.c.l.b16 %v108
    %v180 = vunpack.c.l.b16 %v109
    %v181 = vunpack.c.l.b16 %v110
    %v182 = vunpack.c.l.b16 %v111
    %v183 = vunpack.c.l.b16 %v112
    %v184 = vunpack.c.l.b16 %v113
    %v185 = vunpack.c.l.b16 %v114
    %v186 = vunpack.c.l.b16 %v115
    %v187 = vunpack.c.l.b16 %v116
    %v188 = vunpack.c.l.b16 %v117
    %v189 = vunpack.c.l.b16 %v118
    %v190 = vunpack.c.l.b16 %v119
    %v191 = vpack.c.b16 %v160, %v159
    %v192 = vpack.c.b16 %v162, %v161
    %v193 = vpack.c.b16 %v164, %v163
    %v194 = vpack.c.b16 %v166, %v165
    %v195 = vpack.c.b16 %v168, %v167
    %v196 = vpack.c.b16 %v170, %v169
    %v197 = vpack.c.b16 %v172, %v171
    %v198 = vpack.c.b16 %v174, %v173
    %v199 = vpack.c.b16 %v176, %v175
    %v200 = vpack.c.b16 %v178, %v177
    %v201 = vpack.c.b16 %v180, %v179
    %v202 = vpack.c.b16 %v182, %v181
    %v203 = vpack.c.b16 %v184, %v183
    %v204 = vpack.c.b16 %v186, %v185
    %v205 = vpack.c.b16 %v188, %v187
    %v206 = vpack.c.b16 %v190, %v189
    %223 = vmatprep.subr.bf16.mxu0 0
    %224 = vmatpush1.bf16.msra.mxu0 %v191
    %225 = vmatprep.subr.bf16.mxu0 0
    %226 = vmatpush1.bf16.msra.mxu0 %v192
    %227 = vmatprep.subr.bf16.mxu0 0
    %228 = vmatpush1.bf16.msra.mxu0 %v193
    %229 = vmatprep.subr.bf16.mxu0 0
    %230 = vmatpush1.bf16.msra.mxu0 %v194
    %231 = vmatprep.subr.bf16.mxu0 0
    %232 = vmatpush1.bf16.msra.mxu0 %v195
    %233 = vmatprep.subr.bf16.mxu0 0
    %234 = vmatpush1.bf16.msra.mxu0 %v196
    %235 = vmatprep.subr.bf16.mxu0 0
    %236 = vmatpush1.bf16.msra.mxu0 %v197
    %237 = vmatprep.subr.bf16.mxu0 0
    %238 = vmatpush1.bf16.msra.mxu0 %v198
    %239 = vmatprep.subr.bf16.mxu0 0
    %240 = vmatpush1.bf16.msra.mxu0 %v199
    %241 = vmatprep.subr.bf16.mxu0 0
    %242 = vmatpush1.bf16.msra.mxu0 %v200
    %243 = vmatprep.subr.bf16.mxu0 0
    %244 = vmatpush1.bf16.msra.mxu0 %v201
    %245 = vmatprep.subr.bf16.mxu0 0
    %246 = vmatpush1.bf16.msra.mxu0 %v202
    %247 = vmatprep.subr.bf16.mxu0 0
    %248 = vmatpush1.bf16.msra.mxu0 %v203
    %249 = vmatprep.subr.bf16.mxu0 0
    %250 = vmatpush1.bf16.msra.mxu0 %v204
    %251 = vmatprep.subr.bf16.mxu0 0
    %252 = vmatpush1.bf16.msra.mxu0 %v205
    %253 = vmatprep.subr.bf16.mxu0 0
    %254 = vmatpush1.bf16.msra.mxu0 %v206
    %255 = vmatprep.mubr.bf16.mxu0 %v124
    %256 = vmatmul.mubr.bf16.gmra.mrb[0].mxu0 %v123
    %v257 = vpop.f32.mrb[0].mxu0
    %v258 = vadd.f32 0.0, %v257
    %v259 = vpop.f32.mrb[0].mxu0
    %v260 = vpop.f32.mrb[0].mxu0
    %v261 = vpop.f32.mrb[0].mxu0
    %262 = vdwg.mxu0
    %v263 = vrot.slane %v258, 4
    %v264 = vadd.f32 %v258, %v263
    %v265 = vrot.slane %v264, 2
    %v266 = vadd.f32 %v264, %v265
    %v267 = vrot.slane %v266, 1
    %v268 = vadd.f32 %v266, %v267
    %v269 = vrcp.pop 8.0
    %v270 = vmul.f32 %v268, %v269
    %v271 = vsub.f32 %v258, %v270
    %v272 = vmul.f32 %v271, %v271
    %v273 = vrot.slane %v272, 4
    %v274 = vadd.f32 %v272, %v273
    %v275 = vrot.slane %v274, 2
    %v276 = vadd.f32 %v274, %v275
    %v277 = vrot.slane %v276, 1
    %v278 = vadd.f32 %v276, %v277
    %v279 = vmul.f32 %v278, %v269
    %v280 = vld [vmem:[%s2] sm:$0x1]
    %v281 = vadd.f32 %v279, 1e-05
    %v282 = vrsqrt.pop %v281
    %v283 = vmul.f32 %v280, %v282
    %v285 = vlaneseq
    %v286 = vshrl.u32 %v285, 7
    %v287 = vsub.s32 0, %v286
    %v288 = vrot.slane %v283, %v287
    %v290 = vmul.f32 %v271, %v288
    %v291 = vld [vmem:[%s3] sm:$0x1]
    %v293 = vlaneseq
    %v294 = vshrl.u32 %v293, 7
    %v295 = vsub.s32 0, %v294
    %v296 = vrot.slane %v291, %v295
    %v298 = vadd.f32 %v290, %v296
    %v299 = vmax.f32 %v298, 0.0
    %v300 = vpack.c.bf16 %v299, %v299
    %v301 = vld [vmem:[#allocation7] sm:$0xf]
    %v302 = vld [vmem:[#allocation7 + $0x4] sm:$0xf]
    %v303 = vld [vmem:[#allocation7 + $0x8] sm:$0xf]
    %v304 = vld [vmem:[#allocation7 + $0xc] sm:$0xf]
    %v305 = vld [vmem:[#allocation7 + $0x10] sm:$0xf]
    %v306 = vld [vmem:[#allocation7 + $0x14] sm:$0xf]
    %v307 = vld [vmem:[#allocation7 + $0x18] sm:$0xf]
    %v308 = vld [vmem:[#allocation7 + $0x1c] sm:$0xf]
    %v309 = vld [vmem:[#allocation7 + $0x20] sm:$0xf]
    %v310 = vld [vmem:[#allocation7 + $0x24] sm:$0xf]
    %v311 = vld [vmem:[#allocation7 + $0x28] sm:$0xf]
    %v312 = vld [vmem:[#allocation7 + $0x2c] sm:$0xf]
    %v313 = vld [vmem:[#allocation7 + $0x30] sm:$0xf]
    %v314 = vld [vmem:[#allocation7 + $0x34] sm:$0xf]
    %v315 = vld [vmem:[#allocation7 + $0x38] sm:$0xf]
    %v316 = vld [vmem:[#allocation7 + $0x3c] sm:$0xf]
    %v333 = vunpack.c.l.b16 %v301
    %v334 = vunpack.c.l.b16 %v302
    %v335 = vunpack.c.l.b16 %v303
    %v336 = vunpack.c.l.b16 %v304
    %v337 = vunpack.c.l.b16 %v305
    %v338 = vunpack.c.l.b16 %v306
    %v339 = vunpack.c.l.b16 %v307
    %v340 = vunpack.c.l.b16 %v308
    %v341 = vunpack.c.l.b16 %v309
    %v342 = vunpack.c.l.b16 %v310
    %v343 = vunpack.c.l.b16 %v311
    %v344 = vunpack.c.l.b16 %v312
    %v345 = vunpack.c.l.b16 %v313
    %v346 = vunpack.c.l.b16 %v314
    %v347 = vunpack.c.l.b16 %v315
    %v348 = vunpack.c.l.b16 %v316
    %v349 = vpack.c.b16 %v334, %v333
    %v350 = vpack.c.b16 %v336, %v335
    %v351 = vpack.c.b16 %v338, %v337
    %v352 = vpack.c.b16 %v340, %v339
    %v353 = vpack.c.b16 %v342, %v341
    %v354 = vpack.c.b16 %v344, %v343
    %v355 = vpack.c.b16 %v346, %v345
    %v356 = vpack.c.b16 %v348, %v347
    %365 = vmatprep.subr.bf16.mxu0 0
    %366 = vmatpush1.bf16.msra.mxu0 %v349
    %367 = vmatprep.subr.bf16.mxu0 0
    %368 = vmatpush1.bf16.msra.mxu0 %v350
    %369 = vmatprep.subr.bf16.mxu0 0
    %370 = vmatpush1.bf16.msra.mxu0 %v351
    %371 = vmatprep.subr.bf16.mxu0 0
    %372 = vmatpush1.bf16.msra.mxu0 %v352
    %373 = vmatprep.subr.bf16.mxu0 0
    %374 = vmatpush1.bf16.msra.mxu0 %v353
    %375 = vmatprep.subr.bf16.mxu0 0
    %376 = vmatpush1.bf16.msra.mxu0 %v354
    %377 = vmatprep.subr.bf16.mxu0 0
    %378 = vmatpush1.bf16.msra.mxu0 %v355
    %379 = vmatprep.subr.bf16.mxu0 0
    %380 = vmatpush1.bf16.msra.mxu0 %v356
    %381 = vmatprep.subr.bf16.mxu0 0
    %382 = vmatpush1.bf16.msra.mxu0 0
    %383 = vmatprep.subr.bf16.mxu0 0
    %384 = vmatpush1.bf16.msra.mxu0 0
    %385 = vmatprep.subr.bf16.mxu0 0
    %386 = vmatpush1.bf16.msra.mxu0 0
    %387 = vmatprep.subr.bf16.mxu0 0
    %388 = vmatpush1.bf16.msra.mxu0 0
    %389 = vmatprep.subr.bf16.mxu0 0
    %390 = vmatpush1.bf16.msra.mxu0 0
    %391 = vmatprep.subr.bf16.mxu0 0
    %392 = vmatpush1.bf16.msra.mxu0 0
    %393 = vmatprep.subr.bf16.mxu0 0
    %394 = vmatpush1.bf16.msra.mxu0 0
    %395 = vmatprep.subr.bf16.mxu0 0
    %396 = vmatpush1.bf16.msra.mxu0 0
    %397 = vmatprep.mubr.bf16.mxu0 0
    %398 = vmatmul.mubr.bf16.gmra.mrb[0].mxu0 %v300
    %v399 = vpop.f32.mrb[0].mxu0
    %v400 = vadd.f32 0.0, %v399
    %v401 = vpop.f32.mrb[0].mxu0
    %v402 = vpop.f32.mrb[0].mxu0
    %v403 = vpop.f32.mrb[0].mxu0
    %404 = vdwg.mxu0
    %v405 = vrot.slane %v400, 4
    %v406 = vadd.f32 %v400, %v405
    %v407 = vrot.slane %v406, 2
    %v408 = vadd.f32 %v406, %v407
    %v409 = vrot.slane %v408, 1
    %v410 = vadd.f32 %v408, %v409
    %v411 = vmul.f32 %v410, %v269
    %v412 = vsub.f32 %v400, %v411
    %v413 = vmul.f32 %v412, %v412
    %v414 = vrot.slane %v413, 4
    %v415 = vadd.f32 %v413, %v414
    %v416 = vrot.slane %v415, 2
    %v417 = vadd.f32 %v415, %v416
    %v418 = vrot.slane %v417, 1
    %v419 = vadd.f32 %v417, %v418
    %v420 = vmul.f32 %v419, %v269
    %v421 = vld [vmem:[%s5] sm:$0x1]
    %v422 = vadd.f32 %v420, 1e-05
    %v423 = vrsqrt.pop %v422
    %v424 = vmul.f32 %v421, %v423
    %v426 = vlaneseq
    %v427 = vshrl.u32 %v426, 7
    %v428 = vsub.s32 0, %v427
    %v429 = vrot.slane %v424, %v428
    %v431 = vmul.f32 %v412, %v429
    %v432 = vld [vmem:[%s6] sm:$0x1]
    %v434 = vlaneseq
    %v435 = vshrl.u32 %v434, 7
    %v436 = vsub.s32 0, %v435
    %v437 = vrot.slane %v432, %v436
    %v439 = vadd.f32 %v431, %v437
    %v440 = vmax.f32 %v439, 0.0
    %v441 = vpack.c.bf16 %v440, %v440
    %v442 = vld [vmem:[#allocation8] sm:$0xf]
    %v443 = vld [vmem:[#allocation8 + $0x4] sm:$0xf]
    %v444 = vld [vmem:[#allocation8 + $0x8] sm:$0xf]
    %v445 = vld [vmem:[#allocation8 + $0xc] sm:$0xf]
    %v446 = vld [vmem:[#allocation8 + $0x10] sm:$0xf]
    %v447 = vld [vmem:[#allocation8 + $0x14] sm:$0xf]
    %v448 = vld [vmem:[#allocation8 + $0x18] sm:$0xf]
    %v449 = vld [vmem:[#allocation8 + $0x1c] sm:$0xf]
    %v450 = vld [vmem:[#allocation8 + $0x20] sm:$0xf]
    %v451 = vld [vmem:[#allocation8 + $0x24] sm:$0xf]
    %v452 = vld [vmem:[#allocation8 + $0x28] sm:$0xf]
    %v453 = vld [vmem:[#allocation8 + $0x2c] sm:$0xf]
    %v454 = vld [vmem:[#allocation8 + $0x30] sm:$0xf]
    %v455 = vld [vmem:[#allocation8 + $0x34] sm:$0xf]
    %v456 = vld [vmem:[#allocation8 + $0x38] sm:$0xf]
    %v457 = vld [vmem:[#allocation8 + $0x3c] sm:$0xf]
    %v458 = vld [vmem:[%s8] sm:$0x1]
    %v460 = vlaneseq
    %v461 = vshrl.u32 %v460, 7
    %v462 = vsub.s32 0, %v461
    %v463 = vrot.slane %v458, %v462
    %v481 = vunpack.c.l.b16 %v442
    %v482 = vunpack.c.l.b16 %v443
    %v483 = vunpack.c.l.b16 %v444
    %v484 = vunpack.c.l.b16 %v445
    %v485 = vunpack.c.l.b16 %v446
    %v486 = vunpack.c.l.b16 %v447
    %v487 = vunpack.c.l.b16 %v448
    %v488 = vunpack.c.l.b16 %v449
    %v489 = vunpack.c.l.b16 %v450
    %v490 = vunpack.c.l.b16 %v451
    %v491 = vunpack.c.l.b16 %v452
    %v492 = vunpack.c.l.b16 %v453
    %v493 = vunpack.c.l.b16 %v454
    %v494 = vunpack.c.l.b16 %v455
    %v495 = vunpack.c.l.b16 %v456
    %v496 = vunpack.c.l.b16 %v457
    %v497 = vpack.c.b16 %v482, %v481
    %v498 = vpack.c.b16 %v484, %v483
    %v499 = vpack.c.b16 %v486, %v485
    %v500 = vpack.c.b16 %v488, %v487
    %v501 = vpack.c.b16 %v490, %v489
    %v502 = vpack.c.b16 %v492, %v491
    %v503 = vpack.c.b16 %v494, %v493
    %v504 = vpack.c.b16 %v496, %v495
    %513 = vmatprep.subr.bf16.mxu0 0
    %514 = vmatpush1.bf16.msra.mxu0 %v497
    %515 = vmatprep.subr.bf16.mxu0 0
    %516 = vmatpush1.bf16.msra.mxu0 %v498
    %517 = vmatprep.subr.bf16.mxu0 0
    %518 = vmatpush1.bf16.msra.mxu0 %v499
    %519 = vmatprep.subr.bf16.mxu0 0
    %520 = vmatpush1.bf16.msra.mxu0 %v500
    %521 = vmatprep.subr.bf16.mxu0 0
    %522 = vmatpush1.bf16.msra.mxu0 %v501
    %523 = vmatprep.subr.bf16.mxu0 0
    %524 = vmatpush1.bf16.msra.mxu0 %v502
    %525 = vmatprep.subr.bf16.mxu0 0
    %526 = vmatpush1.bf16.msra.mxu0 %v503
    %527 = vmatprep.subr.bf16.mxu0 0
    %528 = vmatpush1.bf16.msra.mxu0 %v504
    %529 = vmatprep.subr.bf16.mxu0 0
    %530 = vmatpush1.bf16.msra.mxu0 0
    %531 = vmatprep.subr.bf16.mxu0 0
    %532 = vmatpush1.bf16.msra.mxu0 0
    %533 = vmatprep.subr.bf16.mxu0 0
    %534 = vmatpush1.bf16.msra.mxu0 0
    %535 = vmatprep.subr.bf16.mxu0 0
    %536 = vmatpush1.bf16.msra.mxu0 0
    %537 = vmatprep.subr.bf16.mxu0 0
    %538 = vmatpush1.bf16.msra.mxu0 0
    %539 = vmatprep.subr.bf16.mxu0 0
    %540 = vmatpush1.bf16.msra.mxu0 0
    %541 = vmatprep.subr.bf16.mxu0 0
    %542 = vmatpush1.bf16.msra.mxu0 0
    %543 = vmatprep.subr.bf16.mxu0 0
    %544 = vmatpush1.bf16.msra.mxu0 0
    %545 = vmatprep.mubr.bf16.mxu0 0
    %546 = vmatmul.mubr.bf16.gmra.mrb[0].mxu0 %v441
    %v547 = vpop.f32.mrb[0].mxu0
    %v548 = vadd.f32 %v463, %v547
    %v549 = vpop.f32.mrb[0].mxu0
    %v550 = vpop.f32.mrb[0].mxu0
    %v551 = vpop.f32.mrb[0].mxu0
    %552 = vdwg.mxu0
    %553 = vst [vmem:[#allocation10] sm:$0xff] %v548
    // Predicated region
    $region54: #{tpu_custom_call.1} parent=1 // pred_check
      _
    $region55: #{tpu_custom_call.1} parent=1 // pred_check_branch
      %555 = sbr.rel (0) target = $region57
    $region56: #{tpu_custom_call.1} parent=1 // pred_region
      %s557 = ssub.s32 128, 128
      %558 = vsyncadd [#allocation4], %s557
      %s560 = sshll.u32 [#allocation10], 4
      %s561 = int_to_ptr.vmem [resolvable:$true] %s560
      %563 = dma.vmem_to_hbm [thread:$0]  %s561, 128, %s9, [#allocation4]
    $region57: #{tpu_custom_call.1} parent=1 // pred_fallthru
      _
    // Predicated region
    $region58: #{tpu_custom_call.1} parent=1 // pred_check
      _
    $region59: #{tpu_custom_call.1} parent=1 // pred_check_branch
      %565 = sbr.rel (0) target = $region61
    $region60: #{tpu_custom_call.1} parent=1 // pred_region
      %566 = dma.done [#allocation4], 128
    $region61: #{tpu_custom_call.1} parent=1 // pred_fallthru
      _
    %567 = vsyncpa [#allocation3], 1
    %568 = vsyncpa [#allocation6], 1
    %569 = vsyncpa [#allocation9], 1
    %570 = vsyncpa [#allocation4], 1

</llo_original>
